<compile_context>
chip_gen: v6e
topology: v6e:2x2x1
jax: 0.10.0
libtpu: 0.0.40
codegen_flags: <defaults>
</compile_context>

<pallas_src>
import math

import jax
import jax.numpy as jnp
from jax.experimental import pallas as pl
from jax.experimental.pallas import tpu as pltpu

GROUPED_BANDS = [[4, 3, 2], [8, 4, 2], [13, 1, 3], [12, 8, 2]]  # 1-indexed, as in the module


# ---------------------------------------------------------------------------
# Kernel 1: per-group "base model" linear encoders, tiled over the Dp contraction.
#   grid = (G, Kc); G parallel (v7x megacore), Kc = reduction axis (arbitrary, last).
#   The f32 output block is resident across Kc and doubles as the accumulator.
# ---------------------------------------------------------------------------
def base_encoder_kernel(x_ref, w_ref, b_ref, out_ref):
    k = pl.program_id(1)

    @pl.when(k == 0)
    def _init():
        # start from the broadcast bias; the k-grid then accumulates partial dots
        out_ref[...] = jnp.zeros_like(out_ref) + b_ref[...]

    # bf16 x bf16 on the MXU, f32 accumulation directly in the resident output block.
    out_ref[...] += jnp.dot(x_ref[...], w_ref[...], preferred_element_type=jnp.float32)


# ---------------------------------------------------------------------------
# Kernel 2: multi-head self-attention over the G group tokens + regression head.
#   grid = (ncol,) over lane chunks of the fused QKV weight (double-buffered DMA).
#   The attention/out-proj/head run in the last grid step on the VMEM qkv scratch.
#   No in-kernel reshapes/transposes: all per-group access is leading-axis indexing
#   of [G, B, *] tiles; the only concat is the lane-direction group concat.
# ---------------------------------------------------------------------------
def make_attn_head_kernel(G, B, E, NH, P, tc):
    hd = E // NH
    scale = 1.0 / math.sqrt(hd)
    f32 = jnp.float32
    bf16 = jnp.bfloat16

    def kernel(f_ref, wqkv_ref, bqkv_ref, pool_ref, expand_ref,
               wo_ref, bo_ref, wh_ref, bh_ref, out_ref, qkv_ref):
        c = pl.program_id(0)

        # ---- every step: one lane chunk of the fused QKV projection (bf16 x bf16) ----
        start = pl.multiple_of(c * tc, tc)
        w_c = wqkv_ref[...]                                   # [E, tc] bf16
        b_c = bqkv_ref[...]                                   # [1, tc] f32
        for g in range(G):
            xg = f_ref[g].astype(bf16)                        # [B, E]
            qkv_ref[g, :, pl.ds(start, tc)] = (
                jnp.dot(xg, w_c, preferred_element_type=f32) + b_c)

        # ---- last step: attention over the G group tokens + regression head ----
        @pl.when(c == pl.num_programs(0) - 1)
        def _attn_and_head():
            pool = pool_ref[...]                              # [E, NH]  0/1 head-pool
            expand = expand_ref[...]                          # [NH, E]  = pool.T
            wo = wo_ref[...]                                  # [E, E]   bf16
            bo = bo_ref[...]                                  # [1, E]   f32

            k_list = [qkv_ref[j, :, E:2 * E] for j in range(G)]        # [B, E] each
            v_list = [qkv_ref[j, :, 2 * E:3 * E] for j in range(G)]    # [B, E] each

            o_cols = []
            for i in range(G):
                q_i = qkv_ref[i, :, 0:E] * scale                        # [B, E]
                # per-head scores s_j[b, h] = sum_d q_i[b,h,d] * k_j[b,h,d]
                s = [jnp.dot(q_i * k_list[j], pool, preferred_element_type=f32)
                     for j in range(G)]                                 # G x [B, NH]
                m = s[0]
                for j in range(1, G):
                    m = jnp.maximum(m, s[j])
                e = [jnp.exp(sj - m) for sj in s]
                den = e[0]
                for j in range(1, G):
                    den = den + e[j]
                # approx reciprocal (EUP slot): ~1e-3 relative error on the attention
                # weights; well inside the model tolerance, swap for exact 1/den if not.
                inv = pl.reciprocal(den, approx=True)

                # weighted values: broadcast head weights over their hd lanes via expand
                attn_i = jnp.zeros((B, E), f32)
                for j in range(G):
                    wj = jnp.dot(e[j] * inv, expand, preferred_element_type=f32)  # [B, E]
                    attn_i = attn_i + wj * v_list[j]

                # per-group out-projection (bf16 weights, f32 accumulation)
                o_i = jnp.dot(attn_i.astype(bf16), wo,
                              preferred_element_type=f32) + bo          # [B, E]
                o_cols.append(o_i)

            cat = jnp.concatenate(o_cols, axis=-1)                      # [B, G*E] lane concat
            reg = jnp.dot(cat.astype(bf16), wh_ref[...],
                          preferred_element_type=f32) + bh_ref[...]     # [B, 2P]

            # single lane-contiguous store: [:, :P] = mean, [:, P:] = exp(log_var).
            # Guard the dead half so extreme mean logits never hit exp().
            col = jax.lax.broadcasted_iota(jnp.int32, (B, 2 * P), 1)
            log_var = jnp.where(col < P, 0.0, reg)
            out_ref[...] = jnp.where(col < P, reg, jnp.exp(log_var))

    return kernel


def init_params(key, G, Dp, E, P):
    """Deterministic synthetic parameters, PyTorch [out_features, in_features] orientation."""
    ks = jax.random.split(key, 8)
    s = 0.02
    return {
        "base_w": jax.random.normal(ks[0], (G, E, Dp), jnp.float32) * s,
        "base_b": jax.random.normal(ks[1], (G, E), jnp.float32) * s,
        "in_proj_w": jax.random.normal(ks[2], (3 * E, E), jnp.float32) * s,
        "in_proj_b": jax.random.normal(ks[3], (3 * E,), jnp.float32) * s,
        "out_proj_w": jax.random.normal(ks[4], (E, E), jnp.float32) * s,
        "out_proj_b": jax.random.normal(ks[5], (E,), jnp.float32) * s,
        "head_w": jax.random.normal(ks[6], (2 * P, G * E), jnp.float32) * s,
        "head_b": jax.random.normal(ks[7], (2 * P,), jnp.float32) * s,
    }


def _pick_tk(Dp, max_tk=4096):
    """(tk, padded_Dp): largest 128-multiple <= max_tk dividing Dp; else pad Dp up."""
    if Dp <= max_tk:
        return Dp, Dp
    cap = (max_tk // 128) * 128
    for cand in range(cap, 127, -128):
        if Dp % cand == 0:
            return cand, Dp
    return cap, ((Dp + cap - 1) // cap) * cap


def _pick_col_tile(n, cap=1024):
    """Largest 128-multiple <= cap dividing n, else the full width n."""
    if n <= cap or n % 128 != 0:
        return n
    for cand in range((min(cap, n) // 128) * 128, 127, -128):
        if n % cand == 0:
            return cand
    return n


def vit_ms_uncertainty_forward(pixel_values, params, emb_size, num_heads, predict_target,
                               *, tk=None, tc=None):
    B, C, H, W = pixel_values.shape
    G = len(GROUPED_BANDS)
    E, NH, P = emb_size, num_heads, predict_target
    assert E % NH == 0
    Dp = 3 * H * W

    # glue: gather each group's 3 bands (1-indexed -> 0-indexed), flatten -> [G, B, Dp].
    # At small B the encoder weights dominate HBM traffic (xg is ~B/E of the weight bytes),
    # so the host-side band gather stays outside the kernel.
    # TODO(synk): at large B the gather could move in-kernel (scalar-prefetched band table).
    xg = jnp.stack(
        [pixel_values[:, [b - 1 for b in GROUPED_BANDS[g]], :, :].reshape(B, Dp)
         for g in range(G)], axis=0).astype(jnp.bfloat16)

    # base-encoder weights as [G, Dp, E]; bf16 to halve weight streaming.
    # TODO(synk): on v5e/v6e an int8 weight path (scale folded into the bias/init) halves
    # traffic again; not valid on v7x (fp8 only), so bf16 is the portable default.
    wb = jnp.transpose(params["base_w"], (0, 2, 1)).astype(jnp.bfloat16)
    bb = params["base_b"].reshape(G, 1, E).astype(jnp.float32)

    if tk is None:
        tk, dp_pad = _pick_tk(Dp)
    else:
        dp_pad = ((Dp + tk - 1) // tk) * tk
    assert tk % 128 == 0 or tk == dp_pad, "contraction tile must be lane-aligned or full"
    if dp_pad > Dp:  # zero-padded K columns contribute nothing to the matmul
        xg = jnp.pad(xg, ((0, 0), (0, 0), (0, dp_pad - Dp)))
        wb = jnp.pad(wb, ((0, 0), (0, dp_pad - Dp), (0, 0)))
    kc = dp_pad // tk

    # double-buffered x/w chunks + resident f32 output; raise v5e's 16 MiB scoped default.
    vmem_need = 2 * (B * tk * 2 + tk * E * 2) + B * E * 4 + 4 * E
    vmem_limit = max(32 * 1024 * 1024, int(1.5 * vmem_need))

    feats = pl.pallas_call(
        base_encoder_kernel,
        grid=(G, kc),
        in_specs=[
            pl.BlockSpec((None, B, tk), lambda g, k: (g, 0, k)),   # xg chunk  [B, tk]
            pl.BlockSpec((None, tk, E), lambda g, k: (g, k, 0)),   # wb chunk  [tk, E]
            pl.BlockSpec((None, 1, E), lambda g, k: (g, 0, 0)),    # bias      [1, E]
        ],
        out_specs=pl.BlockSpec((None, B, E), lambda g, k: (g, 0, 0)),
        out_shape=jax.ShapeDtypeStruct((G, B, E), jnp.float32),
        compiler_params=pltpu.CompilerParams(
            dimension_semantics=("parallel", "arbitrary"),
            vmem_limit_bytes=vmem_limit),
    )(xg, wb, bb)

    # ---- kernel 2 weights: bf16 for the large matrices (f32 biases / 0-1 pool matrices) ----
    wqkv = params["in_proj_w"].T.astype(jnp.bfloat16)             # [E, 3E]
    bqkv = params["in_proj_b"].reshape(1, 3 * E).astype(jnp.float32)
    wo = params["out_proj_w"].T.astype(jnp.bfloat16)              # [E, E]
    bo = params["out_proj_b"].reshape(1, E).astype(jnp.float32)
    wh = params["head_w"].T.astype(jnp.bfloat16)                  # [G*E, 2P]
    bh = params["head_b"].reshape(1, 2 * P).astype(jnp.float32)

    hd = E // NH
    # 0/1 head-pool matrix (sums each head's hd lanes); tiny, kept f32 (exact).
    pool = (jnp.arange(E)[:, None] // hd == jnp.arange(NH)[None, :]).astype(jnp.float32)
    expand = pool.T

    if tc is None:
        tc = _pick_col_tile(3 * E)
    assert (3 * E) % tc == 0 and (tc % 128 == 0 or tc == 3 * E)
    ncol = (3 * E) // tc

    def const(shape):
        return pl.BlockSpec(shape, lambda c: (0,) * len(shape))

    out = pl.pallas_call(
        make_attn_head_kernel(G, B, E, NH, P, tc),
        grid=(ncol,),
        in_specs=[
            const((G, B, E)),                                   # feats (resident)
            pl.BlockSpec((E, tc), lambda c: (0, c)),            # wqkv column chunk
            pl.BlockSpec((1, tc), lambda c: (0, c)),            # bqkv column chunk
            const((E, NH)), const((NH, E)),                     # pool / expand
            const((E, E)), const((1, E)),                       # wo / bo
            const((G * E, 2 * P)), const((1, 2 * P)),           # wh / bh
        ],
        out_specs=const((B, 2 * P)),
        out_shape=jax.ShapeDtypeStruct((B, 2 * P), jnp.float32),
        scratch_shapes=[pltpu.VMEM((G, B, 3 * E), jnp.float32)],
        compiler_params=pltpu.CompilerParams(dimension_semantics=("arbitrary",)),
    )(feats, wqkv, bqkv, pool, expand, wo, bo, wh, bh)

    return out[:, :P], out[:, P:]


def reference_forward(pixel_values, params, emb_size, num_heads, predict_target):
    """Pure-JAX mirror of the PyTorch forward (same bf16 weight casts as the kernels)."""
    B = pixel_values.shape[0]
    G = len(GROUPED_BANDS)
    E, NH, P = emb_size, num_heads, predict_target
    hd = E // NH
    f32, bf16 = jnp.float32, jnp.bfloat16

    feats = []
    for g in range(G):
        idx = [b - 1 for b in GROUPED_BANDS[g]]
        xg = pixel_values[:, idx, :, :].reshape(B, -1).astype(bf16)
        w = params["base_w"][g].T.astype(bf16)
        feats.append(jnp.dot(xg, w, preferred_element_type=f32) + params["base_b"][g])
    F = jnp.stack(feats, axis=0)                                     # [G, B, E]

    wqkv = params["in_proj_w"].T.astype(bf16)
    qkv = jnp.einsum("gbe,ef->gbf", F.astype(bf16), wqkv,
                     preferred_element_type=f32) + params["in_proj_b"]
    q, k, v = qkv[..., :E], qkv[..., E:2 * E], qkv[..., 2 * E:]

    def split_heads(t):                                              # [G,B,E] -> [B,NH,G,hd]
        return t.reshape(G, B, NH, hd).transpose(1, 2, 0, 3)

    qh, kh, vh = split_heads(q), split_heads(k), split_heads(v)
    s = jnp.einsum("bhid,bhjd->bhij", qh, kh) / math.sqrt(hd)
    a = jax.nn.softmax(s, axis=-1)
    o = jnp.einsum("bhij,bhjd->bhid", a, vh)
    o = o.transpose(2, 0, 1, 3).reshape(G, B, E)

    wo = params["out_proj_w"].T.astype(bf16)
    o = jnp.einsum("gbe,ef->gbf", o.astype(bf16), wo,
                   preferred_element_type=f32) + params["out_proj_b"]
    cat = jnp.concatenate([o[i] for i in range(G)], axis=-1)         # [B, G*E]
    wh = params["head_w"].T.astype(bf16)
    reg = jnp.dot(cat.astype(bf16), wh, preferred_element_type=f32) + params["head_b"]
    return reg[:, :P], jnp.exp(reg[:, P:])


if __name__ == "__main__":
    B, C, H, W = 2, 13, 16, 16          # 13 channels: grouped_bands references band 13
    E, NH, P = 128, 8, 1                # small emb_size, num_heads=8, predict_target=1
    key = jax.random.PRNGKey(0)
    kx, kp = jax.random.split(key)
    pixel_values = jax.random.normal(kx, (B, C, H, W), jnp.float32)
    params = init_params(kp, len(GROUPED_BANDS), 3 * H * W, E, P)

    # tk=256 -> 3 reduction steps in kernel 1; tc=128 -> 3 QKV column chunks in kernel 2,
    # exercising both pipelined grid axes at test scale.
    mean, var = vit_ms_uncertainty_forward(pixel_values, params, E, NH, P, tk=256, tc=128)
    jax.block_until_ready((mean, var))

    ref_mean, ref_var = reference_forward(pixel_values, params, E, NH, P)
    assert mean.shape == (B, P) and var.shape == (B, P)
    assert jnp.allclose(mean, ref_mean, atol=2e-3, rtol=1e-2), "mean mismatch"
    assert jnp.allclose(var, ref_var, atol=2e-3, rtol=1e-2), "variance mismatch"
    print("KERNEL_OK")
</pallas_src>

<mosaic_0001>
module attributes {stable_mosaic.version = 11 : i64} {
  func.func @base_encoder_kernel(%arg0: i32, %arg1: i32, %arg2: memref<1x2x256xbf16, #tpu.memory_space<vmem>>, %arg3: memref<1x256x128xbf16, #tpu.memory_space<vmem>>, %arg4: memref<1x1x128xf32, #tpu.memory_space<vmem>>, %arg5: memref<1x2x128xf32, #tpu.memory_space<vmem>>) attributes {dimension_semantics = [#tpu.dimension_semantics<parallel>, #tpu.dimension_semantics<arbitrary>], iteration_bounds = array<i64: 4, 3>, scalar_prefetch = 0 : i64, scratch_operands = 0 : i64, tpu.core_type = #tpu.core_type<tc>, window_params = [{transform_indices = @transform_0, window_bounds = array<i64: 1, 2, 256>}, {transform_indices = @transform_1, window_bounds = array<i64: 1, 256, 128>}, {transform_indices = @transform_2, window_bounds = array<i64: 1, 1, 128>}, {transform_indices = @transform_3, window_bounds = array<i64: 1, 2, 128>}]} {
    %c0_i32 = arith.constant 0 : i32
    %0 = arith.cmpi eq, %arg1, %c0_i32 : i32
    %1 = arith.extui %0 : i1 to i32
    %c0_i32_0 = arith.constant 0 : i32
    %2 = arith.cmpi ne, %1, %c0_i32_0 : i32
    scf.if %2 {
      %cst_12 = arith.constant 0.000000e+00 : f32
      %14 = vector.broadcast %cst_12 : f32 to vector<2x128xf32>
      %c0_13 = arith.constant 0 : index
      %c0_14 = arith.constant 0 : index
      %c0_15 = arith.constant 0 : index
      %15 = vector.load %arg4[%c0_13, %c0_14, %c0_15] : memref<1x1x128xf32, #tpu.memory_space<vmem>>, vector<1x1x128xf32>
      %16 = vector.shape_cast %15 : vector<1x1x128xf32> to vector<1x128xf32>
      %17 = vector.broadcast %16 : vector<1x128xf32> to vector<2x128xf32>
      %18 = arith.addf %14, %17 : vector<2x128xf32>
      %c0_16 = arith.constant 0 : index
      %c0_17 = arith.constant 0 : index
      %c0_18 = arith.constant 0 : index
      %19 = vector.load %arg5[%c0_16, %c0_17, %c0_18] : memref<1x2x128xf32, #tpu.memory_space<vmem>>, vector<1x2x128xf32>
      %20 = vector.shape_cast %19 : vector<1x2x128xf32> to vector<2x128xf32>
      %21 = vector.shape_cast %18 : vector<2x128xf32> to vector<1x2x128xf32>
      tpu.vector_store %arg5[%c0_16, %c0_17, %c0_18], %21 {strides = array<i32>} : memref<1x2x128xf32, #tpu.memory_space<vmem>>, vector<1x2x128xf32>,
    } else {
    }
    %c0 = arith.constant 0 : index
    %c0_1 = arith.constant 0 : index
    %c0_2 = arith.constant 0 : index
    %3 = vector.load %arg5[%c0, %c0_1, %c0_2] : memref<1x2x128xf32, #tpu.memory_space<vmem>>, vector<1x2x128xf32>
    %4 = vector.shape_cast %3 : vector<1x2x128xf32> to vector<2x128xf32>
    %c0_3 = arith.constant 0 : index
    %c0_4 = arith.constant 0 : index
    %c0_5 = arith.constant 0 : index
    %5 = vector.load %arg2[%c0_3, %c0_4, %c0_5] : memref<1x2x256xbf16, #tpu.memory_space<vmem>>, vector<1x2x256xbf16>
    %6 = vector.shape_cast %5 : vector<1x2x256xbf16> to vector<2x256xbf16>
    %c0_6 = arith.constant 0 : index
    %c0_7 = arith.constant 0 : index
    %c0_8 = arith.constant 0 : index
    %7 = vector.load %arg3[%c0_6, %c0_7, %c0_8] : memref<1x256x128xbf16, #tpu.memory_space<vmem>>, vector<1x256x128xbf16>
    %8 = vector.shape_cast %7 : vector<1x256x128xbf16> to vector<256x128xbf16>
    %cst = arith.constant dense<0.000000e+00> : vector<2x128xf32>
    %9 = tpu.matmul %6, %8, %cst {dimension_numbers = #tpu.dot_dimension_numbers<[1], [0], [0], [1], [0, 0, 1, 1], [], []>} : vector<2x256xbf16>, vector<256x128xbf16>, vector<2x128xf32> -> vector<2x128xf32>
    %10 = arith.addf %4, %9 : vector<2x128xf32>
    %c0_9 = arith.constant 0 : index
    %c0_10 = arith.constant 0 : index
    %c0_11 = arith.constant 0 : index
    %11 = vector.load %arg5[%c0_9, %c0_10, %c0_11] : memref<1x2x128xf32, #tpu.memory_space<vmem>>, vector<1x2x128xf32>
    %12 = vector.shape_cast %11 : vector<1x2x128xf32> to vector<2x128xf32>
    %13 = vector.shape_cast %10 : vector<2x128xf32> to vector<1x2x128xf32>
    tpu.vector_store %arg5[%c0_9, %c0_10, %c0_11], %13 {strides = array<i32>} : memref<1x2x128xf32, #tpu.memory_space<vmem>>, vector<1x2x128xf32>,
    return
  }
  func.func @transform_0(%arg0: i32, %arg1: i32) -> (i32, i32, i32) {
    %c0_i32 = arith.constant 0 : i32
    %c0_i32_0 = arith.constant 0 : i32
    return %arg0, %c0_i32, %arg1 : i32, i32, i32
  }
  func.func @transform_1(%arg0: i32, %arg1: i32) -> (i32, i32, i32) {
    %c0_i32 = arith.constant 0 : i32
    %c0_i32_0 = arith.constant 0 : i32
    return %arg0, %arg1, %c0_i32 : i32, i32, i32
  }
  func.func @transform_2(%arg0: i32, %arg1: i32) -> (i32, i32, i32) {
    %c0_i32 = arith.constant 0 : i32
    %c0_i32_0 = arith.constant 0 : i32
    %c0_i32_1 = arith.constant 0 : i32
    return %arg0, %c0_i32, %c0_i32_0 : i32, i32, i32
  }
  func.func @transform_3(%arg0: i32, %arg1: i32) -> (i32, i32, i32) {
    %c0_i32 = arith.constant 0 : i32
    %c0_i32_0 = arith.constant 0 : i32
    %c0_i32_1 = arith.constant 0 : i32
    return %arg0, %c0_i32, %c0_i32_0 : i32, i32, i32
  }
}

</mosaic_0001>

<llo_original>
// kernel: tpu_custom_call.1
$region0: #{tpu_custom_call.1}
  #allocation0 [shape = 'u32[]', space=smem, size = 0x4, offset = 0x4, fixed_abs, tag = 'smem constant byte address 0x4 - core index']
  #allocation1 [shape = 'u32[144,128]{1,0:T(1,128)}', space=vmem, size = 0x12000, scoped, tag = 'internal scratch']
  %s0 = inlined_call_operand.hbm [shape: bf16[4,2,768], index: 0, kind: input, shape index: {}]
  %s1 = inlined_call_operand.hbm [shape: bf16[4,768,128], index: 1, kind: input, shape index: {}]
  %s2 = inlined_call_operand.hbm [shape: f32[4,1,128], index: 2, kind: input, shape index: {}]
  %s3 = inlined_call_operand.hbm [shape: f32[4,2,128], index: 3, kind: output, shape index: {}]
  %s4 = sld [smem:[#allocation0]]
  $region61: #{tpu_custom_call.1} parent=0
    _
  %s6 = ssub.s32 1, %s4
  %s7 = scalar_select 0, %s6, %s4
  $region1: #{tpu_custom_call.1} parent=0
    #allocation2 [shape = 'u8[2048]{0}', space=vmem, size = 0x800, scoped, tag = 'input window, operand 0']
    #allocation3 [shape = 's32[2]{0}', space=sflag, size = 0x8, scoped, tag = 'scoped memory for tpu_custom_call.1']
    #allocation4 [shape = 's32[2]{0}', space=sflag, size = 0x8, scoped, tag = 'scoped memory for tpu_custom_call.1']
    #allocation5 [shape = 'u8[131072]{0}', space=vmem, size = 0x20000, scoped, tag = 'input window, operand 1']
    #allocation6 [shape = 's32[2]{0}', space=sflag, size = 0x8, scoped, tag = 'scoped memory for tpu_custom_call.1']
    #allocation7 [shape = 'u8[1024]{0}', space=vmem, size = 0x400, scoped, tag = 'input window, operand 2']
    #allocation8 [shape = 'u8[2048]{0}', space=vmem, size = 0x800, scoped, tag = 'output window, operand 0']
    %8 = vsyncpa [#allocation3], 0
    %s9 = scalar_lea.sflag [#allocation3], 1
    %10 = vsyncpa %s9, 0
    %11 = vsyncpa [#allocation6], 0
    %s12 = scalar_lea.sflag [#allocation6], 1
    %13 = vsyncpa %s12, 0
    %14 = vsyncpa [#allocation4], 0
    %s15 = scalar_lea.sflag [#allocation4], 1
    %16 = vsyncpa %s15, 0
    loop: start=0, step=1, limit=14
    $region2: #{tpu_custom_call.1} parent=1 // loop_pre_header
      _
    $region3: #{tpu_custom_call.1} parent=1 // loop_header
      %s18 = sphi 0, %s22
      %p19 = scmp.ge.s32.totalorder %s18, 14
      %s25 = sphi 0, %s37
      %s26 = sphi 0, %s33
      %s27 = sphi 0, %s25
      %s28 = sphi 0, %s26
      %s29 = sphi 0, %s27
      %s30 = sphi 0, %s28
      %s42 = sphi 0, %s44
      %s45 = sphi 0, %s42
      %s46 = sphi 0, %s45
      %s62 = sphi 0, %s46
      %s70 = sphi 0, %s72
      %s73 = sphi 0, %s70
      %s74 = sphi 0, %s73
      %s90 = sphi 0, %s74
      %s96 = sphi 0, %s98
      %s99 = sphi 0, %s96
      %s100 = sphi 0, %s99
      %s116 = sphi 0, %s100
      %s122 = sphi 0, %s124
      %s125 = sphi 0, %s122
      %s126 = sphi 0, %s125
      %s142 = sphi 0, %s126
    $region4: #{tpu_custom_call.1} parent=1 // loop_header_branch
      %21 = sbr.rel (%p19) target = $region8
    $region5: #{tpu_custom_call.1} parent=1 // loop_body
      %s23 = ssub.s32 %s18, 1
      %s24 = ssub.s32 %s18, 2
      %s31 = sadd.s32 1, %s26
      %p32 = scmp.ge.s32.totalorder %s31, 3
      %s33 = scalar_select %p32, 0, %s31
      %s34 = sadd.s32 1, %s25
      %s35 = scalar_select %p32, %s34, %s25
      %p36 = scmp.ge.s32.totalorder %s35, 4
      %s37 = scalar_select %p36, 0, %s35
      %s38 = ssub.s32 %s25, %s37
      %s39 = ssub.s32 %s26, %s33
      %s40 = sor.u32 %s38, %s39
      %p41 = scmp.eq.s32.totalorder %s40, 0
      %s43 = sadd.s32 %s42, 1
      %s44 = scalar_select %p41, %s42, %s43
      %p47 = pneg %p41
      %p48 = scmp.eq.s32.totalorder %s18, 11
      %p49 = por %p47, %p48
      %p50 = scmp.ne.s32.totalorder %s42, %s45
      %p51 = scmp.eq.s32.totalorder %s18, 0
      %p52 = por %p50, %p51
      %p53 = scmp.ne.s32.totalorder %s42, %s45
      %p54 = scmp.eq.s32.totalorder %s23, 11
      %p55 = por %p53, %p54
      %p56 = scmp.ne.s32.totalorder %s45, %s46
      %p57 = scmp.eq.s32.totalorder %s23, 0
      %p58 = por %p56, %p57
      %p59 = scmp.ne.s32.totalorder %s45, %s46
      %p60 = scmp.eq.s32.totalorder %s24, 11
      %p61 = por %p59, %p60
      %p63 = scmp.ne.s32.totalorder %s46, %s62
      %p64 = scmp.eq.s32.totalorder %s24, 0
      %p65 = por %p63, %p64
      %s66 = ssub.s32 %s25, %s37
      %s67 = ssub.s32 %s26, %s33
      %s68 = sor.u32 %s66, %s67
      %p69 = scmp.eq.s32.totalorder %s68, 0
      %s71 = sadd.s32 %s70, 1
      %s72 = scalar_select %p69, %s70, %s71
      %p75 = pneg %p69
      %p76 = scmp.eq.s32.totalorder %s18, 11
      %p77 = por %p75, %p76
      %p78 = scmp.ne.s32.totalorder %s70, %s73
      %p79 = scmp.eq.s32.totalorder %s18, 0
      %p80 = por %p78, %p79
      %p81 = scmp.ne.s32.totalorder %s70, %s73
      %p82 = scmp.eq.s32.totalorder %s23, 11
      %p83 = por %p81, %p82
      %p84 = scmp.ne.s32.totalorder %s73, %s74
      %p85 = scmp.eq.s32.totalorder %s23, 0
      %p86 = por %p84, %p85
      %p87 = scmp.ne.s32.totalorder %s73, %s74
      %p88 = scmp.eq.s32.totalorder %s24, 11
      %p89 = por %p87, %p88
      %p91 = scmp.ne.s32.totalorder %s74, %s90
      %p92 = scmp.eq.s32.totalorder %s24, 0
      %p93 = por %p91, %p92
      %s94 = ssub.s32 %s25, %s37
      %p95 = scmp.eq.s32.totalorder %s94, 0
      %s97 = sadd.s32 %s96, 1
      %s98 = scalar_select %p95, %s96, %s97
      %p101 = pneg %p95
      %p102 = scmp.eq.s32.totalorder %s18, 11
      %p103 = por %p101, %p102
      %p104 = scmp.ne.s32.totalorder %s96, %s99
      %p105 = scmp.eq.s32.totalorder %s18, 0
      %p106 = por %p104, %p105
      %p107 = scmp.ne.s32.totalorder %s96, %s99
      %p108 = scmp.eq.s32.totalorder %s23, 11
      %p109 = por %p107, %p108
      %p110 = scmp.ne.s32.totalorder %s99, %s100
      %p111 = scmp.eq.s32.totalorder %s23, 0
      %p112 = por %p110, %p111
      %p113 = scmp.ne.s32.totalorder %s99, %s100
      %p114 = scmp.eq.s32.totalorder %s24, 11
      %p115 = por %p113, %p114
      %p117 = scmp.ne.s32.totalorder %s100, %s116
      %p118 = scmp.eq.s32.totalorder %s24, 0
      %p119 = por %p117, %p118
      %s120 = ssub.s32 %s25, %s37
      %p121 = scmp.eq.s32.totalorder %s120, 0
      %s123 = sadd.s32 %s122, 1
      %s124 = scalar_select %p121, %s122, %s123
      %p127 = pneg %p121
      %p128 = scmp.eq.s32.totalorder %s18, 11
      %p129 = por %p127, %p128
      %p130 = scmp.ne.s32.totalorder %s122, %s125
      %p131 = scmp.eq.s32.totalorder %s18, 0
      %p132 = por %p130, %p131
      %p133 = scmp.ne.s32.totalorder %s122, %s125
      %p134 = scmp.eq.s32.totalorder %s23, 11
      %p135 = por %p133, %p134
      %p136 = scmp.ne.s32.totalorder %s125, %s126
      %p137 = scmp.eq.s32.totalorder %s23, 0
      %p138 = por %p136, %p137
      %p139 = scmp.ne.s32.totalorder %s125, %s126
      %p140 = scmp.eq.s32.totalorder %s24, 11
      %p141 = por %p139, %p140
      %p143 = scmp.ne.s32.totalorder %s126, %s142
      %p144 = scmp.eq.s32.totalorder %s24, 0
      %p145 = por %p143, %p144
      %p146 = scmp.le.s32.totalorder 1, %s18
      %p147 = scmp.lt.s32.totalorder %s18, 13
      %p148 = pnand %p146, %p147
      %p149 = pneg %p148
      // Predicated region
      $region9: #{tpu_custom_call.1} parent=5 // pred_check
        _
      $region10: #{tpu_custom_call.1} parent=5 // pred_check_branch
        %151 = sbr.rel (%p148) target = $region12
      $region11: #{tpu_custom_call.1} parent=5 // pred_region
        %s152 = ssub.s32 %s18, 1
      $region12: #{tpu_custom_call.1} parent=5 // pred_fallthru
        _
      %p153 = scmp.lt.s32.totalorder %s18, 12
      // Predicated region
      $region13: #{tpu_custom_call.1} parent=5 // pred_check
        %p154 = pneg %p153
      $region14: #{tpu_custom_call.1} parent=5 // pred_check_branch
        %156 = sbr.rel (%p154) target = $region16
      $region15: #{tpu_custom_call.1} parent=5 // pred_region
        // Predicated region
        $region17: #{tpu_custom_call.1} parent=15 // pred_check
          %p157 = pneg %p52
        $region18: #{tpu_custom_call.1} parent=15 // pred_check_branch
          %159 = sbr.rel (%p157) target = $region20
        $region19: #{tpu_custom_call.1} parent=15 // pred_region
          %s160 = sand.u32 %s42, 1
          %s161 = scalar_lea.sflag [#allocation3], %s160
          %s162 = sand.u32 %s42, 1
          %s163 = smul.addr %s162, 2
          %s164 = scalar_lea.vmem [#allocation2], %s163
          %s165 = smul.u32 2, %s26
          %s167 = ssub.s32 32, 32
          %168 = vsyncadd %s161, %s167
          %s169 = smul.addr %s25, 6
          %s170 = sadd.s32 %s165, %s169
          %s171 = smul.addr %s170, 16
          %s172 = scalar_lea.hbm %s0, %s171
          %s174 = sshll.u32 %s164, 4
          %s175 = int_to_ptr.vmem [resolvable:$true] %s174
          %177 = dma.hbm_to_vmem [thread:$0]  %s172, 32, %s175, %s161
        $region20: #{tpu_custom_call.1} parent=15 // pred_fallthru
          _
        // Predicated region
        $region21: #{tpu_custom_call.1} parent=15 // pred_check
          %p178 = pneg %p80
        $region22: #{tpu_custom_call.1} parent=15 // pred_check_branch
          %180 = sbr.rel (%p178) target = $region24
        $region23: #{tpu_custom_call.1} parent=15 // pred_region
          %s181 = sand.u32 %s18, 1
          %s182 = scalar_lea.sflag [#allocation6], %s181
          %s183 = sand.u32 %s70, 1
          %s184 = smul.addr %s183, 128
          %s185 = scalar_lea.vmem [#allocation5], %s184
          %s186 = smul.u32 32, %s26
          %s188 = ssub.s32 2048, 2048
          %189 = vsyncadd %s182, %s188
          %s190 = smul.addr %s25, 96
          %s191 = sadd.s32 %s186, %s190
          %s192 = smul.addr %s191, 64
          %s193 = scalar_lea.hbm %s1, %s192
          %s194 = sshll.u32 %s185, 4
          %s195 = int_to_ptr.vmem [resolvable:$true] %s194
          %200 = dma.hbm_to_vmem [thread:$0]  %s193, 2048, %s195, %s182, 64, 64, 4
        $region24: #{tpu_custom_call.1} parent=15 // pred_fallthru
          _
        // Predicated region
        $region25: #{tpu_custom_call.1} parent=15 // pred_check
          %p201 = pneg %p106
        $region26: #{tpu_custom_call.1} parent=15 // pred_check_branch
          %203 = sbr.rel (%p201) target = $region28
        $region27: #{tpu_custom_call.1} parent=15 // pred_region
          %s204 = sand.u32 %s18, 1
          %s205 = scalar_lea.sflag [#allocation6], %s204
          %s206 = sand.u32 %s96, 1
          %s207 = scalar_lea.vmem [#allocation7], %s206
          %s209 = ssub.s32 16, 16
          %210 = vsyncadd %s205, %s209
          %s211 = smul.addr %s25, 16
          %s212 = scalar_lea.hbm %s2, %s211
          %s214 = sshll.u32 %s207, 4
          %s215 = int_to_ptr.vmem [resolvable:$true] %s214
          %217 = dma.hbm_to_vmem [thread:$0]  %s212, 16, %s215, %s205
        $region28: #{tpu_custom_call.1} parent=15 // pred_fallthru
          _
      $region16: #{tpu_custom_call.1} parent=5 // pred_fallthru
        _
      %p218 = scmp.le.s32.totalorder 1, %s18
      %p219 = scmp.lt.s32.totalorder %s18, 13
      %p220 = pnand %p218, %p219
      %p221 = pneg %p220
      // Predicated region
      $region29: #{tpu_custom_call.1} parent=5 // pred_check
        _
      $region30: #{tpu_custom_call.1} parent=5 // pred_check_branch
        %223 = sbr.rel (%p220) target = $region32
      $region31: #{tpu_custom_call.1} parent=5 // pred_region
        %s224 = ssub.s32 %s18, 1
        %s225 = sand.u32 %s45, 1
        %s226 = scalar_lea.sflag [#allocation3], %s225
        %s227 = sand.u32 %s45, 1
        %s228 = smul.addr %s227, 2
        %s229 = scalar_lea.vmem [#allocation2], %s228
        // Predicated region
        $region33: #{tpu_custom_call.1} parent=31 // pred_check
          %p230 = pneg %p58
        $region34: #{tpu_custom_call.1} parent=31 // pred_check_branch
          %232 = sbr.rel (%p230) target = $region36
        $region35: #{tpu_custom_call.1} parent=31 // pred_region
          %233 = dma.done %s226, 32
        $region36: #{tpu_custom_call.1} parent=31 // pred_fallthru
          _
        %s234 = sand.u32 %s23, 1
        %s235 = scalar_lea.sflag [#allocation6], %s234
        %s236 = sand.u32 %s73, 1
        %s237 = smul.addr %s236, 128
        %s238 = scalar_lea.vmem [#allocation5], %s237
        // Predicated region
        $region37: #{tpu_custom_call.1} parent=31 // pred_check
          %p239 = pneg %p86
        $region38: #{tpu_custom_call.1} parent=31 // pred_check_branch
          %241 = sbr.rel (%p239) target = $region40
        $region39: #{tpu_custom_call.1} parent=31 // pred_region
          %242 = dma.done %s235, 2048
        $region40: #{tpu_custom_call.1} parent=31 // pred_fallthru
          _
        %s243 = sand.u32 %s23, 1
        %s244 = scalar_lea.sflag [#allocation6], %s243
        %s245 = sand.u32 %s99, 1
        %s246 = scalar_lea.vmem [#allocation7], %s245
        // Predicated region
        $region41: #{tpu_custom_call.1} parent=31 // pred_check
          %p247 = pneg %p112
        $region42: #{tpu_custom_call.1} parent=31 // pred_check_branch
          %249 = sbr.rel (%p247) target = $region44
        $region43: #{tpu_custom_call.1} parent=31 // pred_region
          %250 = dma.done %s244, 16
        $region44: #{tpu_custom_call.1} parent=31 // pred_fallthru
          _
        %s251 = sand.u32 %s45, 1
        %s252 = scalar_lea.sflag [#allocation3], %s251
        %s253 = sand.u32 %s45, 1
        %s254 = smul.addr %s253, 2
        %s255 = scalar_lea.vmem [#allocation2], %s254
        %p256 = pneg %p58
        %p257 = pneg %p55
        %s258 = sand.u32 %s23, 1
        %s259 = scalar_lea.sflag [#allocation6], %s258
        %s260 = sand.u32 %s73, 1
        %s261 = smul.addr %s260, 128
        %s262 = scalar_lea.vmem [#allocation5], %s261
        %p263 = pneg %p86
        %p264 = pneg %p83
        %s265 = sand.u32 %s23, 1
        %s266 = scalar_lea.sflag [#allocation6], %s265
        %s267 = sand.u32 %s99, 1
        %s268 = scalar_lea.vmem [#allocation7], %s267
        %p269 = pneg %p112
        %p270 = pneg %p109
        %p271 = pneg %p138
        %p272 = pneg %p135
        %s273 = sand.u32 %s125, 1
        %s274 = scalar_lea.sflag [#allocation4], %s273
        %s275 = sand.u32 %s125, 1
        %s276 = smul.addr %s275, 2
        %s277 = scalar_lea.vmem [#allocation8], %s276
        %s278 = smul.u32 2, %s28
        %s279 = smul.u32 32, %s28
        %p281 = scmp.eq.s32.totalorder %s28, 0
        // Predicated region
        $region45: #{tpu_custom_call.1} parent=31 // pred_check
          %p282 = pneg %p281
        $region46: #{tpu_custom_call.1} parent=31 // pred_check_branch
          %284 = sbr.rel (%p282) target = $region48
        $region47: #{tpu_custom_call.1} parent=31 // pred_region
          %v285 = vld [vmem:[%s246] sm:$0x1]
          %v287 = vlaneseq
          %v288 = vshrl.u32 %v287, 7
          %v289 = vsub.s32 0, %v288
          %v290 = vrot.slane %v285, %v289
          %v292 = vadd.f32 %v290, 0.0
          %293 = vst [vmem:[%s277] sm:$0x3] %v292
        $region48: #{tpu_custom_call.1} parent=31 // pred_fallthru
          _
        %v294 = vld [vmem:[%s277] sm:$0x3]
        %v295 = vld [vmem:[%s229] sm:$0x3]
        %v296 = vld [vmem:[%s238] sm:$0xf]
        %v297 = vld [vmem:[%s238 + $0x4] sm:$0xf]
        %v298 = vld [vmem:[%s238 + $0x8] sm:$0xf]
        %v299 = vld [vmem:[%s238 + $0xc] sm:$0xf]
        %v300 = vld [vmem:[%s238 + $0x10] sm:$0xf]
        %v301 = vld [vmem:[%s238 + $0x14] sm:$0xf]
        %v302 = vld [vmem:[%s238 + $0x18] sm:$0xf]
        %v303 = vld [vmem:[%s238 + $0x1c] sm:$0xf]
        %v304 = vld [vmem:[%s238 + $0x20] sm:$0xf]
        %v305 = vld [vmem:[%s238 + $0x24] sm:$0xf]
        %v306 = vld [vmem:[%s238 + $0x28] sm:$0xf]
        %v307 = vld [vmem:[%s238 + $0x2c] sm:$0xf]
        %v308 = vld [vmem:[%s238 + $0x30] sm:$0xf]
        %v309 = vld [vmem:[%s238 + $0x34] sm:$0xf]
        %v310 = vld [vmem:[%s238 + $0x38] sm:$0xf]
        %v311 = vld [vmem:[%s238 + $0x3c] sm:$0xf]
        %v312 = vld [vmem:[%s238 + $0x40] sm:$0xf]
        %v313 = vld [vmem:[%s238 + $0x44] sm:$0xf]
        %v314 = vld [vmem:[%s238 + $0x48] sm:$0xf]
        %v315 = vld [vmem:[%s238 + $0x4c] sm:$0xf]
        %v316 = vld [vmem:[%s238 + $0x50] sm:$0xf]
        %v317 = vld [vmem:[%s238 + $0x54] sm:$0xf]
        %v318 = vld [vmem:[%s238 + $0x58] sm:$0xf]
        %v319 = vld [vmem:[%s238 + $0x5c] sm:$0xf]
        %v320 = vld [vmem:[%s238 + $0x60] sm:$0xf]
        %v321 = vld [vmem:[%s238 + $0x64] sm:$0xf]
        %v322 = vld [vmem:[%s238 + $0x68] sm:$0xf]
        %v323 = vld [vmem:[%s238 + $0x6c] sm:$0xf]
        %v324 = vld [vmem:[%s238 + $0x70] sm:$0xf]
        %v325 = vld [vmem:[%s238 + $0x74] sm:$0xf]
        %v326 = vld [vmem:[%s238 + $0x78] sm:$0xf]
        %v327 = vld [vmem:[%s238 + $0x7c] sm:$0xf]
        %v330 = vunpack.c.l.s4 1966171168
        %v331 = vunpack.c.0.s8 %v330
        %v332 = vlaneseq
        %v333 = vshrl.u32 %v332, 7
        %v334 = vsub.s32 %v331, %v333
        %v335 = vrot.slane %v295, %v334
        %v336 = vcombine.high %v335, %v335
        %v338 = vunpack.c.l.s4 1966171168
        %v339 = vunpack.c.0.s8 %v338
        %v340 = vlaneseq
        %v341 = vshrl.u32 %v340, 7
        %v342 = vsub.s32 %v339, %v341
        %v343 = vrot.slane %v335, %v342
        %v345 = vunpack.c.l.s4 1966171168
        %v346 = vunpack.c.0.s8 %v345
        %v347 = vlaneseq
        %v348 = vshrl.u32 %v347, 7
        %v349 = vsub.s32 %v346, %v348
        %v350 = vrot.slane %v336, %v349
        %v385 = vunpack.c.l.b16 %v296
        %v386 = vunpack.c.l.b16 %v297
        %v387 = vunpack.c.l.b16 %v298
        %v388 = vunpack.c.l.b16 %v299
        %v389 = vunpack.c.l.b16 %v300
        %v390 = vunpack.c.l.b16 %v301
        %v391 = vunpack.c.l.b16 %v302
        %v392 = vunpack.c.l.b16 %v303
        %v393 = vunpack.c.l.b16 %v304
        %v394 = vunpack.c.l.b16 %v305
        %v395 = vunpack.c.l.b16 %v306
        %v396 = vunpack.c.l.b16 %v307
        %v397 = vunpack.c.l.b16 %v308
        %v398 = vunpack.c.l.b16 %v309
        %v399 = vunpack.c.l.b16 %v310
        %v400 = vunpack.c.l.b16 %v311
        %v401 = vunpack.c.l.b16 %v312
        %v402 = vunpack.c.l.b16 %v313
        %v403 = vunpack.c.l.b16 %v314
        %v404 = vunpack.c.l.b16 %v315
        %v405 = vunpack.c.l.b16 %v316
        %v406 = vunpack.c.l.b16 %v317
        %v407 = vunpack.c.l.b16 %v318
        %v408 = vunpack.c.l.b16 %v319
        %v409 = vunpack.c.l.b16 %v320
        %v410 = vunpack.c.l.b16 %v321
        %v411 = vunpack.c.l.b16 %v322
        %v412 = vunpack.c.l.b16 %v323
        %v413 = vunpack.c.l.b16 %v324
        %v414 = vunpack.c.l.b16 %v325
        %v415 = vunpack.c.l.b16 %v326
        %v416 = vunpack.c.l.b16 %v327
        %v417 = vpack.c.b16 %v386, %v385
        %v418 = vpack.c.b16 %v388, %v387
        %v419 = vpack.c.b16 %v390, %v389
        %v420 = vpack.c.b16 %v392, %v391
        %v421 = vpack.c.b16 %v394, %v393
        %v422 = vpack.c.b16 %v396, %v395
        %v423 = vpack.c.b16 %v398, %v397
        %v424 = vpack.c.b16 %v400, %v399
        %v425 = vpack.c.b16 %v402, %v401
        %v426 = vpack.c.b16 %v404, %v403
        %v427 = vpack.c.b16 %v406, %v405
        %v428 = vpack.c.b16 %v408, %v407
        %v429 = vpack.c.b16 %v410, %v409
        %v430 = vpack.c.b16 %v412, %v411
        %v431 = vpack.c.b16 %v414, %v413
        %v432 = vpack.c.b16 %v416, %v415
        %449 = vmatprep.subr.bf16.mxu0 0
        %450 = vmatpush1.bf16.msra.mxu0 %v424
        %451 = vmatprep.subr.bf16.mxu0 0
        %452 = vmatpush1.bf16.msra.mxu0 %v423
        %453 = vmatprep.subr.bf16.mxu0 0
        %454 = vmatpush1.bf16.msra.mxu0 %v422
        %455 = vmatprep.subr.bf16.mxu0 0
        %456 = vmatpush1.bf16.msra.mxu0 %v421
        %457 = vmatprep.subr.bf16.mxu0 0
        %458 = vmatpush1.bf16.msra.mxu0 %v420
        %459 = vmatprep.subr.bf16.mxu0 0
        %460 = vmatpush1.bf16.msra.mxu0 %v419
        %461 = vmatprep.subr.bf16.mxu0 0
        %462 = vmatpush1.bf16.msra.mxu0 %v418
        %463 = vmatprep.subr.bf16.mxu0 0
        %464 = vmatpush1.bf16.msra.mxu0 %v417
        %465 = vmatprep.subr.bf16.mxu0 0
        %466 = vmatpush2.bf16.msra.mxu0 %v432
        %467 = vmatprep.subr.bf16.mxu0 0
        %468 = vmatpush2.bf16.msra.mxu0 %v431
        %469 = vmatprep.subr.bf16.mxu0 0
        %470 = vmatpush2.bf16.msra.mxu0 %v430
        %471 = vmatprep.subr.bf16.mxu0 0
        %472 = vmatpush2.bf16.msra.mxu0 %v429
        %473 = vmatprep.subr.bf16.mxu0 0
        %474 = vmatpush2.bf16.msra.mxu0 %v428
        %475 = vmatprep.subr.bf16.mxu0 0
        %476 = vmatpush2.bf16.msra.mxu0 %v427
        %477 = vmatprep.subr.bf16.mxu0 0
        %478 = vmatpush2.bf16.msra.mxu0 %v426
        %479 = vmatprep.subr.bf16.mxu0 0
        %480 = vmatpush2.bf16.msra.mxu0 %v425
        %481 = vmatprep.mubr.bf16.mxu0 %v350
        %482 = vmatmul.mubr.bf16.gmra.mxu0 %v343
        %v483 = vpop.f32.mrf.mxu0
        %v484 = vadd.f32 0.0, %v483
        %v485 = vpop.f32.mrf.mxu0
        %v486 = vpop.f32.mrf.mxu0
        %v487 = vpop.f32.mrf.mxu0
        %488 = vdwg.mxu0
        %v489 = vadd.f32 %v294, %v484
        %490 = vst [vmem:[%s277] sm:$0x3] %v489
        %s491 = sand.u32 %s125, 1
        %s492 = scalar_lea.sflag [#allocation4], %s491
        %s493 = sand.u32 %s125, 1
        %s494 = smul.addr %s493, 2
        %s495 = scalar_lea.vmem [#allocation8], %s494
        // Predicated region
        $region49: #{tpu_custom_call.1} parent=31 // pred_check
          %p496 = pneg %p135
        $region50: #{tpu_custom_call.1} parent=31 // pred_check_branch
          %498 = sbr.rel (%p496) target = $region52
        $region51: #{tpu_custom_call.1} parent=31 // pred_region
          %s500 = ssub.s32 32, 32
          %501 = vsyncadd %s492, %s500
          %s502 = smul.addr %s27, 32
          %s503 = scalar_lea.hbm %s3, %s502
          %s505 = sshll.u32 %s495, 4
          %s506 = int_to_ptr.vmem [resolvable:$true] %s505
          %508 = dma.vmem_to_hbm [thread:$0]  %s506, 32, %s503, %s492
        $region52: #{tpu_custom_call.1} parent=31 // pred_fallthru
          _
      $region32: #{tpu_custom_call.1} parent=5 // pred_fallthru
        _
      %p509 = scmp.le.s32.totalorder 2, %s18
      // Predicated region
      $region53: #{tpu_custom_call.1} parent=5 // pred_check
        %p510 = pneg %p509
      $region54: #{tpu_custom_call.1} parent=5 // pred_check_branch
        %512 = sbr.rel (%p510) target = $region56
      $region55: #{tpu_custom_call.1} parent=5 // pred_region
        %s513 = ssub.s32 %s18, 2
        // Predicated region
        $region57: #{tpu_custom_call.1} parent=55 // pred_check
          %p514 = pneg %p141
        $region58: #{tpu_custom_call.1} parent=55 // pred_check_branch
          %516 = sbr.rel (%p514) target = $region60
        $region59: #{tpu_custom_call.1} parent=55 // pred_region
          %s517 = sand.u32 %s126, 1
          %s518 = scalar_lea.sflag [#allocation4], %s517
          %s519 = sand.u32 %s126, 1
          %s520 = smul.addr %s519, 2
          %s521 = scalar_lea.vmem [#allocation8], %s520
          %522 = dma.done %s518, 32
        $region60: #{tpu_custom_call.1} parent=55 // pred_fallthru
          _
      $region56: #{tpu_custom_call.1} parent=5 // pred_fallthru
        _
    $region6: #{tpu_custom_call.1} parent=1 // loop_footer
      %s22 = sadd.s32 1, %s18
    $region7: #{tpu_custom_call.1} parent=1 // loop_footer_branch
      %17 = sbr.rel target = $region3
    $region8: #{tpu_custom_call.1} parent=1 // loop_exit
      _
    %523 = vsyncpa [#allocation3], 1
    %s524 = scalar_lea.sflag [#allocation3], 1
    %525 = vsyncpa %s524, 1
    %526 = vsyncpa [#allocation6], 1
    %s527 = scalar_lea.sflag [#allocation6], 1
    %528 = vsyncpa %s527, 1
    %529 = vsyncpa [#allocation4], 1
    %s530 = scalar_lea.sflag [#allocation4], 1
    %531 = vsyncpa %s530, 1

</llo_original>
